<compile_context>
chip_gen: v6e
topology: v6e:2x2x1
jax: 0.10.0
libtpu: 0.0.40
codegen_flags: <defaults>
</compile_context>

<pallas_src>
import jax
import jax.numpy as jnp
from jax import lax
from jax.experimental import pallas as pl
from jax.experimental.pallas import tpu as pltpu

F32 = jnp.float32
LANE = 128
BN_EPS = 1e-5

# bf16 MXU operands with f32 accumulation (full-rate on v5e/v6e/v7x).
# Set to jnp.float32 for bit-exact parity with the f32 PyTorch reference.
MATMUL_DTYPE = jnp.bfloat16
# Inter-segment activations in HBM (the pipeline is HBM/latency bound here).
STORE_DTYPE = jnp.bfloat16
# True -> tanh-approx GELU on the EUP slot (breaks exact nn.GELU / erf parity).
GELU_TANH_APPROX = False
_MAX_UNROLL_DEPTH = 4


def _round_up(n, m):
    return (n + m - 1) // m * m


# ----------------------- pltpu.roll sign-convention probe ---------------------

_ROLL_SIGN = [0]  # +1: pltpu.roll matches jnp.roll (out[i] = x[i-shift]); -1: opposite


def _detect_roll_sign():
    """Run once, eagerly (before any jit trace)."""
    if _ROLL_SIGN[0] == 0:
        def probe(x_ref, o_ref):
            o_ref[...] = pltpu.roll(x_ref[...], 1, 0)

        x = jnp.broadcast_to(jnp.arange(8, dtype=F32)[:, None], (8, 128))
        y = pl.pallas_call(probe,
                           out_shape=jax.ShapeDtypeStruct((8, 128), F32))(x)
        _ROLL_SIGN[0] = 1 if float(y[0, 0]) == 7.0 else -1
    return _ROLL_SIGN[0]


def _roll_rows(x, shift):
    """jnp.roll-semantics roll along axis 0 (sublanes); non-negative amount."""
    sign = _ROLL_SIGN[0] or 1
    n = x.shape[0]
    return pltpu.roll(x, (sign * shift) % n, 0)


# ----------------------------- fused segment kernel --------------------------


def _make_segment_kernel(has_merge, scale, depth, g, tb, h_out, w_out, cp, pad_in):
    """[optional BN-folded strided conv (PatchMerging)] followed by `depth` x
    (shift -> BN-folded fc1 -> GELU -> fc2 -> +residual) ShiftMixer layers.
    Weights arrive pre-folded / lane-padded / bf16; the activation never leaves
    VMEM inside a segment."""
    rows = tb * h_out * w_out

    def kernel(*refs):
        o_ref = refs[-1]
        idx = 0
        x_ref = refs[idx]; idx += 1
        if has_merge:
            wm_ref, bm_ref = refs[idx], refs[idx + 1]
            idx += 2
        if depth > 0:
            keep_ref, w1_ref, b1_ref, w2_ref, b2_ref = refs[idx:idx + 5]
            idx += 5

        # ---- optional PatchMerging (BN folded into wm/bm) --------------------
        if has_merge:
            xb = x_ref[...]                         # (tb, h_in, w_out, scale*cp_in)
            scp = xb.shape[-1]
            xb = xb.reshape(tb * h_out, scale, w_out, scp)   # free leading reshape
            acc = None
            for i in range(scale):                  # one MXU matmul per kernel row
                xi = xb[:, i, :, :].reshape(rows, scp).astype(MATMUL_DTYPE)
                part = jnp.dot(xi, wm_ref[i], preferred_element_type=F32)
                acc = part if acc is None else acc + part
            x = acc + bm_ref[...]                   # (rows, cp) f32
        else:
            xb = x_ref[...].astype(F32)             # (tb, h, w, cin)
            if pad_in > 0:                          # lane-pad channels in VMEM
                xb = jnp.concatenate(
                    [xb, jnp.zeros(xb.shape[:-1] + (pad_in,), F32)], axis=-1)
            x = xb.reshape(rows, cp)

        # ---- ShiftMixer layers (layers of a stage share parameters) ----------
        if depth > 0:
            keep = keep_ref[...]                                    # (rows, cp) f32
            cidx = lax.broadcasted_iota(jnp.int32, (rows, cp), 1)   # lane iota
            m0 = cidx < g
            m1 = cidx < 2 * g
            m2 = cidx < 3 * g
            m3 = cidx < 4 * g
            w1 = w1_ref[...]                        # bf16, (cp, hp)
            w2 = w2_ref[...]                        # bf16, (hp, cp)
            hp = w1.shape[-1]
            b1 = jnp.broadcast_to(b1_ref[...], (rows, hp))   # hoisted broadcasts
            b2 = jnp.broadcast_to(b2_ref[...], (rows, cp))
            wshift = w_out

            def layer(xc):
                # shift_feat on the row-flattened image: XLU sublane rolls;
                # cross-row / cross-image wraps are zeroed by `keep`.
                x_l = _roll_rows(xc, -1)            # out[w] = x[w+1]
                x_r = _roll_rows(xc, 1)             # out[w] = x[w-1]
                x_u = _roll_rows(xc, -wshift)       # out[h] = x[h+1]
                x_d = _roll_rows(xc, wshift)        # out[h] = x[h-1]
                xs = keep * jnp.where(m0, x_l,
                             jnp.where(m1, x_r,
                             jnp.where(m2, x_u,
                             jnp.where(m3, x_d, xc))))
                h = jnp.dot(xs.astype(MATMUL_DTYPE), w1,
                            preferred_element_type=F32) + b1
                if GELU_TANH_APPROX:
                    h = jax.nn.gelu(h, approximate=True)      # EUP tanh
                else:                                          # exact nn.GELU (erf)
                    h = 0.5 * h * (1.0 + lax.erf(h * 0.7071067811865476))
                h = jnp.dot(h.astype(MATMUL_DTYPE), w2,
                            preferred_element_type=F32) + b2
                return xs + h

            if depth <= _MAX_UNROLL_DEPTH:
                for _ in range(depth):
                    x = layer(x)
            else:
                x = lax.fori_loop(0, depth, lambda _, xc: layer(xc), x)

        o_ref[...] = x.reshape(tb, h_out, w_out, cp).astype(o_ref.dtype)

    return kernel


def _make_keep_mask(tb, h, w, cp, g):
    """f32 multiplicative mask zeroing the wrap-around boundary of each shifted
    channel group (built once per segment in XLA; tiny)."""
    c = jnp.arange(cp)
    hh = jnp.arange(h)
    ww = jnp.arange(w)
    g0 = (c < g)[None, None, :]
    g1 = ((c >= g) & (c < 2 * g))[None, None, :]
    g2 = ((c >= 2 * g) & (c < 3 * g))[None, None, :]
    g3 = ((c >= 3 * g) & (c < 4 * g))[None, None, :]
    last_w = (ww == w - 1)[None, :, None]
    first_w = (ww == 0)[None, :, None]
    last_h = (hh == h - 1)[:, None, None]
    first_h = (hh == 0)[:, None, None]
    kill = (g0 & last_w) | (g1 & first_w) | (g2 & last_h) | (g3 & first_h)
    keep = jnp.where(kill, 0.0, 1.0).astype(F32)              # (h, w, cp)
    return jnp.broadcast_to(keep[None], (tb, h, w, cp)).reshape(tb * h * w, cp)


def _pick_batch_tile(B):
    # >=2 grid steps keeps both v7x TensorCores busy; the extra step costs
    # ~0.35us on single-TC v5e/v6e while the rest of the batch is still folded
    # into the matmul M dimension.
    if B >= 2 and B % 2 == 0:
        return B // 2
    return B


def _run_segment(x, seg, *, tb, out_dtype):
    """x: (B, H, W, C) NHWC activations -> (B, H', W', CP') lane-dense output."""
    B = x.shape[0]
    merge, mixer, depth = seg['merge'], seg['mixer'], seg['depth']

    inputs, in_specs = [], []
    if merge is not None:
        s = merge['scale']
        _, h_in, w_in, cp_in = x.shape
        h_out, w_out = h_in // s, w_in // s
        # free row-major view: lane-merge the s W-columns of each patch
        x_call = x.reshape(B, h_in, w_out, s * cp_in)
        inputs.append(x_call)
        in_specs.append(pl.BlockSpec((tb, h_in, w_out, s * cp_in),
                                     lambda b: (b, 0, 0, 0)))
        inputs += [merge['wm'], merge['bm']]
        in_specs += [pl.BlockSpec(merge['wm'].shape, lambda b: (0, 0, 0)),
                     pl.BlockSpec(merge['bm'].shape, lambda b: (0, 0))]
        cp = merge['wm'].shape[-1]
        pad_in = 0
        scale = s
        in_elems = h_in * w_in * cp_in
    else:
        _, h_in, w_in, cin = x.shape
        h_out, w_out = h_in, w_in
        cp = mixer['w1'].shape[0] if depth > 0 else cin
        pad_in = cp - cin
        inputs.append(x)
        in_specs.append(pl.BlockSpec((tb, h_in, w_in, cin),
                                     lambda b: (b, 0, 0, 0)))
        scale = 1
        in_elems = h_in * w_in * cin

    g = 0
    hp = cp
    if depth > 0:
        g = mixer['g']
        hp = mixer['w1'].shape[1]
        keep = _make_keep_mask(tb, h_out, w_out, cp, g)
        inputs.append(keep)
        in_specs.append(pl.BlockSpec(keep.shape, lambda b: (0, 0)))
        for name in ('w1', 'b1', 'w2', 'b2'):
            inputs.append(mixer[name])
            in_specs.append(pl.BlockSpec(mixer[name].shape, lambda b: (0, 0)))

    rows = tb * h_out * w_out
    # Rough per-step VMEM budget; only raise the scoped limit when needed.
    weight_bytes = sum(int(a.size) * a.dtype.itemsize for a in inputs[1:])
    est = (2 * tb * in_elems * x.dtype.itemsize
           + 2 * rows * cp * jnp.dtype(out_dtype).itemsize
           + weight_bytes
           + 10 * rows * max(cp, hp) * 4)
    cparams = dict(dimension_semantics=("parallel",))
    if est > (32 << 20):
        # TODO(synk): for working sets beyond v7x's 64 MiB VMEM, tile the mixers
        #             over H rows (1-row halo) instead of raising the limit.
        cparams['vmem_limit_bytes'] = int(min(est, 100 << 20))

    kernel = _make_segment_kernel(merge is not None, scale, depth, g,
                                  tb, h_out, w_out, cp, pad_in)
    return pl.pallas_call(
        kernel,
        out_shape=jax.ShapeDtypeStruct((B, h_out, w_out, cp), out_dtype),
        grid_spec=pltpu.PrefetchScalarGridSpec(
            num_scalar_prefetch=0,
            grid=(B // tb,),
            in_specs=in_specs,
            out_specs=pl.BlockSpec((tb, h_out, w_out, cp),
                                   lambda b: (b, 0, 0, 0)),
        ),
        compiler_params=pltpu.CompilerParams(**cparams),
    )(*inputs)


# ----------------------------- parameters ------------------------------------


def _bn_fold(bn):
    s = bn['gamma'] / jnp.sqrt(bn['var'] + BN_EPS)
    t = bn['beta'] - bn['mean'] * s
    return s, t


def init_raw_params(key, conf):
    """Mirrors ShiftViTEncoder.__init__ + its weight-init loop."""
    dims, depths, scales = conf['dims'], conf['depth'], conf['scale_size']
    std, mlp_ratio = conf['init_std'], conf['mlp_ratio']
    keys = iter(jax.random.split(key, 4 * len(depths) + 4))

    def bn_params(dim):  # BatchNorm2d: weight=1, bias=0; running stats (0, 1)
        return dict(gamma=jnp.ones((dim,), F32), beta=jnp.zeros((dim,), F32),
                    mean=jnp.zeros((dim,), F32), var=jnp.ones((dim,), F32))

    stages = []
    for i, depth in enumerate(depths):
        dim = dims[i]
        hidden = int(dim * mlp_ratio)
        # [ShiftMixer(conf, dim)] * n_layers -> layers of a stage share params
        mixer = dict(
            bn=bn_params(dim),
            w1=jax.random.normal(next(keys), (dim, hidden), F32) * std,
            b1=jnp.zeros((hidden,), F32),
            w2=jax.random.normal(next(keys), (hidden, dim), F32) * std,
            b2=jnp.zeros((dim,), F32),
        )
        merge = None
        if scales[i] is not None:
            s = scales[i]
            out_dim = dims[i + 1]
            # conv weight stored as (kh, kw, C_in, C_out); PatchMerging bias=False
            merge = dict(scale=s, bn=bn_params(dim),
                         w=jax.random.normal(next(keys), (s, s, dim, out_dim), F32) * std)
        stages.append(dict(depth=depth, dim=dim, mixer=mixer, merge=merge))
    return stages


def prepare_segments(stages, n_div):
    """One-time parameter prep: fold eval-mode BN into conv/fc weights,
    zero-pad channel & hidden dims to 128 lanes, cast matmul weights to bf16
    and group the block list into fused segments ([leading merge] + mixers)."""
    _detect_roll_sign()   # eager probe (must run before any jit trace)
    segments = []
    pending_merge = None
    for st in stages:
        dim, depth = st['dim'], st['depth']
        cp = _round_up(dim, LANE)
        seg = dict(merge=pending_merge, depth=depth, mixer=None, out_c=dim)
        if depth > 0:
            m = st['mixer']
            hidden = m['w1'].shape[1]
            hp = _round_up(hidden, LANE)
            s_bn, t_bn = _bn_fold(m['bn'])
            w1f = s_bn[:, None] * m['w1']             # BN scale folded into fc1
            b1f = t_bn @ m['w1'] + m['b1']            # BN shift folded into b1
            seg['mixer'] = dict(
                w1=jnp.zeros((cp, hp), F32).at[:dim, :hidden].set(w1f).astype(MATMUL_DTYPE),
                b1=jnp.zeros((1, hp), F32).at[0, :hidden].set(b1f),
                w2=jnp.zeros((hp, cp), F32).at[:hidden, :dim].set(m['w2']).astype(MATMUL_DTYPE),
                b2=jnp.zeros((1, cp), F32).at[0, :dim].set(m['b2']),
                g=dim // n_div,
            )
        if seg['merge'] is not None or depth > 0:     # skip no-op segments
            segments.append(seg)

        if st['merge'] is not None:
            mg = st['merge']
            s = mg['scale']
            out_dim = mg['w'].shape[-1]
            coutp = _round_up(out_dim, LANE)
            # In the module the BN precedes the conv and is over C_in: fold the
            # BN scale onto the conv input-channel axis, BN shift into a bias.
            s_bn, t_bn = _bn_fold(mg['bn'])
            w4 = s_bn[None, None, :, None] * mg['w']                  # (s,s,Cin,Cout)
            bf = jnp.sum(t_bn[None, None, :, None] * mg['w'], axis=(0, 1, 2))
            w4p = jnp.zeros((s, s, cp, coutp), F32).at[:, :, :dim, :out_dim].set(w4)
            pending_merge = dict(
                scale=s,
                # rows ordered (kw, C_in) per kh, matching the lane-merged input view
                wm=w4p.reshape(s, s * cp, coutp).astype(MATMUL_DTYPE),
                bm=jnp.zeros((1, coutp), F32).at[0, :out_dim].set(bf),
                out_c=out_dim,
            )
        else:
            pending_merge = None

    if pending_merge is not None:   # trailing PatchMerging with no mixers after
        segments.append(dict(merge=pending_merge, depth=0, mixer=None,
                             out_c=pending_merge['out_c']))
    return segments


# ----------------------------- full forward ----------------------------------


def shift_vit_encoder_forward(x_nchw, segments):
    """NCHW in -> NCHW out, matching ShiftViTEncoder.forward (eval mode)."""
    B, C0, _, _ = x_nchw.shape
    x = jnp.transpose(x_nchw, (0, 2, 3, 1)).astype(F32)        # NHWC, unpadded
    if segments and segments[0]['merge'] is not None:
        cp0 = _round_up(C0, LANE)                              # rare: leading merge
        x = jnp.pad(x, ((0, 0), (0, 0), (0, 0), (0, cp0 - C0)))
    tb = _pick_batch_tile(B)
    out_c = C0
    for i, seg in enumerate(segments):
        last = (i == len(segments) - 1)
        x = _run_segment(x, seg, tb=tb,
                         out_dtype=F32 if last else STORE_DTYPE)
        out_c = seg['out_c']
    x = x[..., :out_c].astype(F32)                             # drop lane padding
    return jnp.transpose(x, (0, 3, 1, 2))                      # back to NCHW


# ----------------------------- pure-JAX reference -----------------------------


def _bn_eval_ref(x, p):
    s = p['gamma'] / jnp.sqrt(p['var'] + BN_EPS)
    t = p['beta'] - p['mean'] * s
    return x * s[None, :, None, None] + t[None, :, None, None]


def _shift_ref(x, n_div):
    _, C, _, _ = x.shape
    g = C // n_div
    zw = jnp.zeros_like(x[:, :g, :, :1])
    zh = jnp.zeros_like(x[:, :g, :1, :])
    p0 = jnp.concatenate([x[:, 0 * g:1 * g, :, 1:], zw], axis=3)
    p1 = jnp.concatenate([zw, x[:, 1 * g:2 * g, :, :-1]], axis=3)
    p2 = jnp.concatenate([x[:, 2 * g:3 * g, 1:, :], zh], axis=2)
    p3 = jnp.concatenate([zh, x[:, 3 * g:4 * g, :-1, :]], axis=2)
    return jnp.concatenate([p0, p1, p2, p3, x[:, 4 * g:]], axis=1)


def reference_forward(x_nchw, stages, conf):
    n_div = conf['n_div']
    x = x_nchw.astype(F32)
    for st in stages:
        m = st['mixer']
        for _ in range(st['depth']):
            xs = _shift_ref(x, n_div)
            h = _bn_eval_ref(xs, m['bn'])
            h = jnp.einsum('bchw,cd->bdhw', h, m['w1']) + m['b1'][None, :, None, None]
            h = 0.5 * h * (1.0 + lax.erf(h * 0.7071067811865476))
            h = jnp.einsum('bchw,cd->bdhw', h, m['w2']) + m['b2'][None, :, None, None]
            x = xs + h
        if st['merge'] is not None:
            mg = st['merge']
            h = _bn_eval_ref(x, mg['bn'])
            s = mg['scale']
            B, C, H, W = h.shape
            h = h.reshape(B, C, H // s, s, W // s, s)
            x = jnp.einsum('bcipjq,pqcd->bdij', h, mg['w'])
    return x


# ----------------------------- main -------------------------------------------


if __name__ == "__main__":
    conf = dict(
        dims=[32, 64],          # conf.enc.dims
        depth=[1, 1],           # conf.enc.depth
        scale_size=[2, None],   # conf.enc.scale_size
        n_div=8,                # conf.sft.n_div
        mlp_ratio=2.0,          # conf.sft.mlp_ratio
        drop_prob=0.0,          # conf.sft.drop_prob (Dropout(0) == identity)
        init_std=0.02,          # conf.sft.init_std
    )

    key = jax.random.PRNGKey(0)
    k_params, k_x = jax.random.split(key)
    raw = init_raw_params(k_params, conf)
    segments = prepare_segments(raw, conf['n_div'])

    x = jax.random.normal(k_x, (2, conf['dims'][0], 16, 16), F32)   # NCHW input

    fwd = jax.jit(lambda xin: shift_vit_encoder_forward(xin, segments))
    out = jax.block_until_ready(fwd(x))

    assert out.shape == (2, conf['dims'][1], 8, 8), out.shape
    assert bool(jnp.all(jnp.isfinite(out)))

    # Pure-JAX (XLA, f32) eval-mode reference; loose tolerance covers bf16
    # MXU operands and bf16 inter-segment activations.
    ref = reference_forward(x, raw, conf)
    err = float(jnp.max(jnp.abs(out - ref)))
    assert err < 5e-2, f"kernel vs reference max abs err {err}"
    print("KERNEL_OK")
</pallas_src>

<mosaic_0001>
module attributes {stable_mosaic.version = 11 : i64} {
  func.func @probe(%arg0: memref<8x128xf32, #tpu.memory_space<vmem>>, %arg1: memref<8x128xf32, #tpu.memory_space<vmem>>) attributes {dimension_semantics = [], scalar_prefetch = 0 : i64, scratch_operands = 0 : i64, tpu.core_type = #tpu.core_type<tc>} {
    %c0 = arith.constant 0 : index
    %c0_0 = arith.constant 0 : index
    %0 = vector.load %arg0[%c0, %c0_0] : memref<8x128xf32, #tpu.memory_space<vmem>>, vector<8x128xf32>
    %c1_i32 = arith.constant 1 : i32
    %1 = tpu.dynamic_rotate %0 by %c1_i32 dim 0 : vector<8x128xf32>, i32 -> vector<8x128xf32>
    %c0_1 = arith.constant 0 : index
    %c0_2 = arith.constant 0 : index
    %2 = vector.load %arg1[%c0_1, %c0_2] : memref<8x128xf32, #tpu.memory_space<vmem>>, vector<8x128xf32>
    tpu.vector_store %arg1[%c0_1, %c0_2], %1 {strides = array<i32>} : memref<8x128xf32, #tpu.memory_space<vmem>>, vector<8x128xf32>,
    return
  }
}

</mosaic_0001>

<llo_original>
// kernel: tpu_custom_call.1
$region0: #{tpu_custom_call.1}
  #allocation0 [shape = 'u32[]', space=smem, size = 0x4, offset = 0x4, fixed_abs, tag = 'smem constant byte address 0x4 - core index']
  #allocation1 [shape = 'u32[144,128]{1,0:T(1,128)}', space=vmem, size = 0x12000, scoped, tag = 'internal scratch']
  %s0 = inlined_call_operand.hbm [shape: f32[8,128], index: 0, kind: input, shape index: {}]
  %s1 = inlined_call_operand.hbm [shape: f32[8,128], index: 1, kind: output, shape index: {}]
  %s2 = sld [smem:[#allocation0]]
  $region18: #{tpu_custom_call.1} parent=0
    _
  %s4 = ssub.s32 1, %s2
  %s5 = scalar_select 0, %s4, %s2
  $region1: #{tpu_custom_call.1} parent=0
    #allocation2 [shape = 'u8[4096]{0}', space=vmem, size = 0x1000, scoped, tag = 'input window, operand 0, single buffered']
    #allocation3 [shape = 's32[1]{0}', space=sflag, size = 0x4, scoped, tag = 'scoped memory for tpu_custom_call.1']
    #allocation4 [shape = 's32[1]{0}', space=sflag, size = 0x4, scoped, tag = 'scoped memory for tpu_custom_call.1']
    #allocation5 [shape = 'u8[4096]{0}', space=vmem, size = 0x1000, scoped, tag = 'output window, operand 0, single buffered']
    %6 = vsyncpa [#allocation3], 0
    %7 = vsyncpa [#allocation4], 0
    // Predicated region
    $region2: #{tpu_custom_call.1} parent=1 // pred_check
      _
    $region3: #{tpu_custom_call.1} parent=1 // pred_check_branch
      %9 = sbr.rel (0) target = $region5
    $region4: #{tpu_custom_call.1} parent=1 // pred_region
      %s11 = ssub.s32 128, 128
      %12 = vsyncadd [#allocation3], %s11
      %s14 = sshll.u32 [#allocation2], 4
      %s15 = int_to_ptr.vmem [resolvable:$true] %s14
      %17 = dma.hbm_to_vmem [thread:$0]  %s0, 128, %s15, [#allocation3]
    $region5: #{tpu_custom_call.1} parent=1 // pred_fallthru
      _
    // Predicated region
    $region6: #{tpu_custom_call.1} parent=1 // pred_check
      _
    $region7: #{tpu_custom_call.1} parent=1 // pred_check_branch
      %19 = sbr.rel (0) target = $region9
    $region8: #{tpu_custom_call.1} parent=1 // pred_region
      %20 = dma.done [#allocation3], 128
    $region9: #{tpu_custom_call.1} parent=1 // pred_fallthru
      _
    %v21 = vld [vmem:[#allocation2] sm:$0xff]
    %v22 = vrot.slane %v21, 7
    %23 = vst [vmem:[#allocation5] sm:$0xff] %v22
    // Predicated region
    $region10: #{tpu_custom_call.1} parent=1 // pred_check
      _
    $region11: #{tpu_custom_call.1} parent=1 // pred_check_branch
      %25 = sbr.rel (0) target = $region13
    $region12: #{tpu_custom_call.1} parent=1 // pred_region
      %s27 = ssub.s32 128, 128
      %28 = vsyncadd [#allocation4], %s27
      %s30 = sshll.u32 [#allocation5], 4
      %s31 = int_to_ptr.vmem [resolvable:$true] %s30
      %33 = dma.vmem_to_hbm [thread:$0]  %s31, 128, %s1, [#allocation4]
    $region13: #{tpu_custom_call.1} parent=1 // pred_fallthru
      _
    // Predicated region
    $region14: #{tpu_custom_call.1} parent=1 // pred_check
      _
    $region15: #{tpu_custom_call.1} parent=1 // pred_check_branch
      %35 = sbr.rel (0) target = $region17
    $region16: #{tpu_custom_call.1} parent=1 // pred_region
      %36 = dma.done [#allocation4], 128
    $region17: #{tpu_custom_call.1} parent=1 // pred_fallthru
      _
    %37 = vsyncpa [#allocation3], 1
    %38 = vsyncpa [#allocation4], 1

</llo_original>
